<compile_context>
chip_gen: v7x
topology: tpu7x:2x2x1
jax: 0.10.0
libtpu: 0.0.40
codegen_flags: <defaults>
</compile_context>

<pallas_src>
import functools

import jax
import jax.numpy as jnp
from jax.experimental import pallas as pl
from jax.experimental.pallas import tpu as pltpu


def gem_kernel(*refs, static_p, eps, inv_hw):
    """One (ROW_TILE, HW) tile of GeM pooling -> (ROW_TILE, 1) output."""
    if static_p is None:
        p_ref, x_ref, o_ref = refs
        p = p_ref[0]                      # scalar learnable p from SMEM
    else:
        x_ref, o_ref = refs
        p = None

    x = x_ref[...].astype(jnp.float32)
    xc = jnp.maximum(x, eps)              # clamp(min=eps)

    if (static_p is not None and float(static_p) == int(static_p)
            and 1 <= int(static_p) <= 16):
        # Static small integer exponent: pure VPU multiplies, no EUP hot loop.
        xp = xc
        for _ in range(int(static_p) - 1):
            xp = xp * xc
    elif static_p is not None:
        xp = jnp.exp(jnp.float32(static_p) * jnp.log(xc))
    else:
        # Learnable p at runtime: pow via exp/log (EUP).
        xp = jnp.exp(p * jnp.log(xc))

    # avg_pool2d over the full spatial extent == mean over the lane axis.
    mean = jnp.sum(xp, axis=-1, keepdims=True) * inv_hw   # XLU lane reduction

    # Epilogue pow(1/p): one element per (n, c) row -> negligible.
    if static_p is not None:
        out = jnp.exp(jnp.log(mean) * (1.0 / float(static_p)))
    else:
        out = jnp.exp(jnp.log(mean) / p)

    o_ref[...] = out.astype(o_ref.dtype)


def _round_up(a, b):
    return ((a + b - 1) // b) * b


def gem_pallas(x, p, eps=1e-6):
    """x: (N, C, H, W).  p: python number (static fast path) or a scalar /
    (1,) jnp array (learnable parameter path).  Returns (N, C, 1, 1)."""
    N, C, H, W = x.shape
    rows, hw = N * C, H * W

    static_p = float(p) if isinstance(p, (int, float)) else None

    # Zero-copy view: rows on sublanes, full HW on lanes.  Contiguous in HBM,
    # so every block DMA is one contiguous transfer.
    x2 = x.reshape(rows, hw)

    itemsize = jnp.dtype(x.dtype).itemsize
    granule = {4: 8, 2: 16, 1: 32}.get(itemsize, 8)   # sublane tiling per dtype

    # Keep one input block <= ~4 MiB so the double-buffered pair stays well
    # inside the default scoped VMEM on every generation.
    budget_elems = (4 * 1024 * 1024) // itemsize
    row_tile = (budget_elems // max(hw, 1)) // granule * granule
    row_tile = max(granule, min(row_tile, 1024))
    row_tile = min(row_tile, _round_up(rows, granule))

    grid = (pl.cdiv(rows, row_tile),)
    x_spec = pl.BlockSpec((row_tile, hw), lambda i: (i, 0))
    out_spec = pl.BlockSpec((row_tile, 1), lambda i: (i, 0))
    out_shape = jax.ShapeDtypeStruct((rows, 1), x.dtype)

    kernel = functools.partial(
        gem_kernel,
        static_p=static_p,
        eps=float(eps),
        inv_hw=1.0 / float(hw),
    )

    in_specs = [x_spec]
    args = [x2]
    if static_p is None:
        p_arr = jnp.asarray(p, jnp.float32).reshape(1)
        in_specs = [pl.BlockSpec(memory_space=pltpu.MemorySpace.SMEM)] + in_specs
        args = [p_arr] + args

    # Advisory cost estimate for the XLA scheduler.
    n_elem = int(rows) * int(hw)
    if static_p is not None and float(static_p) == int(static_p):
        flops = n_elem * max(int(static_p), 2)
        transcendentals = 2 * int(rows)
    else:
        flops = 3 * n_elem
        transcendentals = 2 * n_elem + 2 * int(rows)
    cost = pl.CostEstimate(
        flops=flops,
        transcendentals=transcendentals,
        bytes_accessed=itemsize * (n_elem + int(rows)),
    )

    out = pl.pallas_call(
        kernel,
        out_shape=out_shape,
        grid=grid,
        in_specs=in_specs,
        out_specs=out_spec,
        compiler_params=pltpu.CompilerParams(
            dimension_semantics=("parallel",)),
        cost_estimate=cost,
    )(*args)

    return out.reshape(N, C, 1, 1)


def gem_reference(x, p, eps=1e-6):
    """Pure-JAX reference mirroring the PyTorch semantics."""
    xc = jnp.maximum(x, eps)
    xp = xc ** p
    pooled = jnp.mean(xp, axis=(-2, -1), keepdims=True)
    return pooled ** (1.0 / p)


if __name__ == "__main__":
    key = jax.random.PRNGKey(0)
    N, C, H, W = 2, 4, 16, 16
    x = jax.random.uniform(key, (N, C, H, W), dtype=jnp.float32)
    eps = 1e-6

    # Parameter init from GeM.__init__: p = ones(1) * 3
    p_param = jnp.ones((1,), jnp.float32) * 3.0
    ref = gem_reference(x, p_param, eps)

    # (a) learnable-p path (runtime scalar in SMEM, module semantics)
    out_dyn = jax.block_until_ready(gem_pallas(x, p_param, eps))
    assert out_dyn.shape == (N, C, 1, 1), out_dyn.shape
    assert jnp.allclose(out_dyn, ref, atol=1e-5, rtol=1e-5), (
        "dynamic-p mismatch", float(jnp.max(jnp.abs(out_dyn - ref))))

    # (b) static-p fast path (trace-time p=3 -> VPU multiplies, no EUP hot loop)
    out_static = jax.block_until_ready(gem_pallas(x, 3.0, eps))
    assert jnp.allclose(out_static, ref, atol=1e-5, rtol=1e-5), (
        "static-p mismatch", float(jnp.max(jnp.abs(out_static - ref))))

    # (c) odd spatial extent (HW=49, not a multiple of 128 -> full-dim block)
    x_small = jax.random.uniform(jax.random.PRNGKey(1), (2, 4, 7, 7),
                                 dtype=jnp.float32)
    out_small = jax.block_until_ready(gem_pallas(x_small, p_param, eps))
    ref_small = gem_reference(x_small, p_param, eps)
    assert jnp.allclose(out_small, ref_small, atol=1e-5, rtol=1e-5), (
        "small-spatial mismatch", float(jnp.max(jnp.abs(out_small - ref_small))))

    # (d) rows not a multiple of the row tile (partial last block path)
    x_odd = jax.random.uniform(jax.random.PRNGKey(2), (3, 5, 8, 8),
                               dtype=jnp.float32)
    out_odd = jax.block_until_ready(gem_pallas(x_odd, p_param, eps))
    ref_odd = gem_reference(x_odd, p_param, eps)
    assert jnp.allclose(out_odd, ref_odd, atol=1e-5, rtol=1e-5), (
        "partial-block mismatch", float(jnp.max(jnp.abs(out_odd - ref_odd))))

    print("KERNEL_OK")
</pallas_src>

<mosaic_0001>
module attributes {stable_mosaic.version = 11 : i64} {
  func.func @gem_kernel(%arg0: i32, %arg1: memref<1xf32, #tpu.memory_space<smem>>, %arg2: memref<8x256xf32, #tpu.memory_space<vmem>>, %arg3: memref<8x1xf32, #tpu.memory_space<vmem>>) attributes {dimension_semantics = [#tpu.dimension_semantics<parallel>], iteration_bounds = array<i64: 1>, scalar_prefetch = 0 : i64, scratch_operands = 0 : i64, tpu.core_type = #tpu.core_type<tc>, window_params = [{transform_indices = @transform_0, window_bounds = array<i64: 1>}, {transform_indices = @transform_1, window_bounds = array<i64: 8, 256>}, {transform_indices = @transform_2, window_bounds = array<i64: 8, 1>}]} {
    %c0 = arith.constant 0 : index
    %0 = memref.load %arg1[%c0] : memref<1xf32, #tpu.memory_space<smem>>
    %c0_0 = arith.constant 0 : index
    %c0_1 = arith.constant 0 : index
    %1 = vector.load %arg2[%c0_0, %c0_1] : memref<8x256xf32, #tpu.memory_space<vmem>>, vector<8x256xf32>
    %cst = arith.constant 9.99999997E-7 : f32
    %2 = vector.broadcast %cst : f32 to vector<8x256xf32>
    %3 = arith.maximumf %1, %2 : vector<8x256xf32>
    %4 = math.log %3 : vector<8x256xf32>
    %5 = vector.broadcast %0 : f32 to vector<8x256xf32>
    %6 = arith.mulf %5, %4 : vector<8x256xf32>
    %7 = math.exp %6 : vector<8x256xf32>
    %cst_2 = arith.constant dense<0.000000e+00> : vector<8xf32>
    %8 = vector.multi_reduction <add>, %7, %cst_2 [1] : vector<8x256xf32> to vector<8xf32>
    %9 = vector.shape_cast %8 : vector<8xf32> to vector<8x1xf32>
    %cst_3 = arith.constant 3.906250e-03 : f32
    %10 = vector.broadcast %cst_3 : f32 to vector<8x1xf32>
    %11 = arith.mulf %9, %10 : vector<8x1xf32>
    %12 = math.log %11 : vector<8x1xf32>
    %13 = vector.broadcast %0 : f32 to vector<8x1xf32>
    %14 = arith.divf %12, %13 : vector<8x1xf32>
    %15 = math.exp %14 : vector<8x1xf32>
    %c0_4 = arith.constant 0 : index
    %c0_5 = arith.constant 0 : index
    %16 = vector.load %arg3[%c0_4, %c0_5] : memref<8x1xf32, #tpu.memory_space<vmem>>, vector<8x1xf32>
    tpu.vector_store %arg3[%c0_4, %c0_5], %15 {strides = array<i32>} : memref<8x1xf32, #tpu.memory_space<vmem>>, vector<8x1xf32>,
    return
  }
  func.func @transform_0(%arg0: i32) -> i32 {
    %c0_i32 = arith.constant 0 : i32
    %c0_i32_0 = arith.constant 0 : i32
    return %c0_i32 : i32
  }
  func.func @transform_1(%arg0: i32) -> (i32, i32) {
    %c0_i32 = arith.constant 0 : i32
    %c0_i32_0 = arith.constant 0 : i32
    return %arg0, %c0_i32 : i32, i32
  }
  func.func @transform_2(%arg0: i32) -> (i32, i32) {
    %c0_i32 = arith.constant 0 : i32
    %c0_i32_0 = arith.constant 0 : i32
    return %arg0, %c0_i32 : i32, i32
  }
}

</mosaic_0001>

<llo_original>
// kernel: tpu_custom_call.1
$region0: #{tpu_custom_call.1}
  #allocation0 [shape = 'u32[]', space=smem, size = 0x4, offset = 0x4, fixed_abs, tag = 'smem constant byte address 0x4 - core index']
  #allocation1 [shape = 'u32[144,128]{1,0:T(1,128)}', space=vmem, size = 0x12000, scoped, tag = 'internal scratch']
  #allocation2 [shape = 'f32[1]{0:T(128)S(6)}', space=smem, size = 0x200, scoped, tag = 'scoped memory for tpu_custom_call.1']
  %s0 = inlined_call_operand.<no memory space> [shape: f32[1], index: 0, kind: input, shape index: {}]
  %s1 = inlined_call_operand.hbm [shape: f32[8,256], index: 1, kind: input, shape index: {}]
  %s2 = inlined_call_operand.vmem [shape: f32[8,1], index: 2, kind: output, shape index: {}]
  %s3 = sld [smem:[#allocation0]]
  $region22: #{tpu_custom_call.1} parent=0
    _
  %s5 = ssub.s32 1, %s3
  %s6 = scalar_select 0, %s5, %s3
  %7 = sst [smem:[#allocation2]] %s0
  $region1: #{tpu_custom_call.1} parent=0
    #allocation3 [shape = 'u8[8192]{0}', space=vmem, size = 0x2000, scoped, tag = 'input window, operand 1, single buffered']
    #allocation4 [shape = 's32[1]{0}', space=sflag, size = 0x4, scoped, tag = 'scoped memory for tpu_custom_call.1']
    %8 = vsyncpa [#allocation4], 0
    // Predicated region
    $region2: #{tpu_custom_call.1} parent=1 // pred_check
      _
    $region3: #{tpu_custom_call.1} parent=1 // pred_check_branch
      %10 = sbr.rel (0) target = $region5
    $region4: #{tpu_custom_call.1} parent=1 // pred_region
      _
    $region5: #{tpu_custom_call.1} parent=1 // pred_fallthru
      _
    // Predicated region
    $region6: #{tpu_custom_call.1} parent=1 // pred_check
      _
    $region7: #{tpu_custom_call.1} parent=1 // pred_check_branch
      %12 = sbr.rel (0) target = $region9
    $region8: #{tpu_custom_call.1} parent=1 // pred_region
      %s14 = ssub.s32 256, 256
      %15 = vsyncadd [#allocation4], %s14
      %s17 = sshll.u32 [#allocation3], 4
      %s18 = int_to_ptr.vmem [resolvable:$true] %s17
      %20 = dma.hbm_to_vmem [thread:$0]  %s1, 256, %s18, [#allocation4]
    $region9: #{tpu_custom_call.1} parent=1 // pred_fallthru
      _
    // Predicated region
    $region10: #{tpu_custom_call.1} parent=1 // pred_check
      _
    $region11: #{tpu_custom_call.1} parent=1 // pred_check_branch
      %22 = sbr.rel (0) target = $region13
    $region12: #{tpu_custom_call.1} parent=1 // pred_region
      %23 = dma.done [#allocation4], 256
    $region13: #{tpu_custom_call.1} parent=1 // pred_fallthru
      _
    %s24 = sld [smem:[#allocation2]]
    %v25 = vld [vmem:[#allocation3] sm:$0xff]
    %v26 = vld [vmem:[#allocation3 + $0x8] sm:$0xff]
    %v27 = vmax.f32 %v25, 1e-06
    %v28 = vmax.f32 %v26, 1e-06
    %v29 = vlog2.pop %v27
    %v30 = vmul.f32 %v29, 0.6931472
    %v31 = vlog2.pop %v28
    %v32 = vmul.f32 %v31, 0.6931472
    %v33 = vstv %s24
    %v34 = vmul.f32 %v33, %v30
    %v35 = vmul.f32 %v33, %v32
    %v36 = vmul.f32 %v34, 1.442695
    %v37 = vpow.pop %v36
    %v38 = vmul.f32 %v35, 1.442695
    %v39 = vpow.pop %v38
    %v40 = vadd.f32 %v37, %v39
    %41 = vadd.xlane.f32.xlu0 %v40
    %v42 = vpop.xlane.xlu0 %41
    %v43 = vmul.f32 %v42, 0.00390625
    %v44 = vlog2.pop %v43
    %v45 = vmul.f32 %v44, 0.6931472
    %v46 = vrcp.pop %v33
    %v47 = vmul.f32 %v45, %v46
    %v48 = vmul.f32 %v47, 1.442695
    %v49 = vpow.pop %v48
    %vm50 = vcmask 7168
    %51 = vst.msk [vmem:[%s2] sm:$0xff] %vm50, %v49
    // Predicated region
    $region14: #{tpu_custom_call.1} parent=1 // pred_check
      _
    $region15: #{tpu_custom_call.1} parent=1 // pred_check_branch
      %53 = sbr.rel (0) target = $region17
    $region16: #{tpu_custom_call.1} parent=1 // pred_region
      _
    $region17: #{tpu_custom_call.1} parent=1 // pred_fallthru
      _
    // Predicated region
    $region18: #{tpu_custom_call.1} parent=1 // pred_check
      _
    $region19: #{tpu_custom_call.1} parent=1 // pred_check_branch
      %55 = sbr.rel (0) target = $region21
    $region20: #{tpu_custom_call.1} parent=1 // pred_region
      _
    $region21: #{tpu_custom_call.1} parent=1 // pred_fallthru
      _
    %56 = vsyncpa [#allocation4], 1

</llo_original>
